<compile_context>
chip_gen: v7x
topology: tpu7x:2x2x1
jax: 0.10.0
libtpu: 0.0.40
codegen_flags: <defaults>
</compile_context>

<pallas_src>
import jax
import jax.numpy as jnp
from jax.experimental import pallas as pl
from jax.experimental.pallas import tpu as pltpu


def _round_up(n, m):
    return (n + m - 1) // m * m


def _repeated_linear_kernel(rid_ref, x_ref, w_ref, b_ref, o_ref):
    # rid_ref: SMEM scalar-prefetch ref (already consumed by the index_maps).
    # x_ref: (TM, Dp)   input tile, compute dtype (bf16)
    # w_ref: (1, Dp, Dp) selected instance weight, pre-transposed to [in, out]
    # b_ref: (1, 1, Dp)  selected instance bias (f32)
    del rid_ref
    x = x_ref[...]                      # (TM, Dp)
    w = w_ref[0]                        # (Dp, Dp), already [in, out]
    b = b_ref[0, 0]                     # (Dp,)
    y = jnp.dot(x, w, preferred_element_type=jnp.float32)   # MXU, f32 acc
    o_ref[...] = (y + b).astype(o_ref.dtype)


def repeated_module_list_forward(x, weights, biases, repeated_id, *,
                                 tm=256, compute_dtype=jnp.bfloat16):
    """Apply instance `repeated_id` of a bank of Linear layers.

    x:           (N, D)      flattened tokens
    weights:     (R, D, D)   stacked nn.Linear weights, PyTorch [out, in]
    biases:      (R, D)      stacked nn.Linear biases
    repeated_id: int32 array of shape (1,)
    Returns (N, D) in x.dtype; computes x @ W[r].T + b[r].
    """
    N, D = x.shape
    R = weights.shape[0]
    assert weights.shape == (R, D, D)
    assert biases.shape == (R, D)

    out_dtype = x.dtype

    # Lane-dense channel dim (multiple of 128) and sublane-aligned row tile.
    Dp = _round_up(D, 128)
    row_align = 16 if compute_dtype == jnp.bfloat16 else 8
    tm_eff = min(tm, _round_up(N, row_align))
    Np = _round_up(N, tm_eff)           # every row block is full -> no edge blocks

    # One-time padding / pre-transpose / bf16 cast outside the kernel.
    x_p = jnp.zeros((Np, Dp), compute_dtype).at[:N, :D].set(
        x.astype(compute_dtype))
    w_t = jnp.zeros((R, Dp, Dp), compute_dtype).at[:, :D, :D].set(
        jnp.swapaxes(weights, 1, 2).astype(compute_dtype))   # -> [in, out]
    b_p = jnp.zeros((R, 1, Dp), jnp.float32).at[:, 0, :D].set(
        biases.astype(jnp.float32))

    grid = (Np // tm_eff,)

    grid_spec = pltpu.PrefetchScalarGridSpec(
        num_scalar_prefetch=1,
        grid=grid,
        in_specs=[
            # x: row-tiled -> DMA pipelining overlaps the MXU work.
            pl.BlockSpec((tm_eff, Dp), lambda i, rid: (i, 0)),
            # weight / bias: block index constant across the grid, so the
            # selected instance is fetched once and stays VMEM-resident.
            pl.BlockSpec((1, Dp, Dp), lambda i, rid: (rid[0], 0, 0)),
            pl.BlockSpec((1, 1, Dp), lambda i, rid: (rid[0], 0, 0)),
        ],
        out_specs=pl.BlockSpec((tm_eff, Dp), lambda i, rid: (i, 0)),
    )

    y_p = pl.pallas_call(
        _repeated_linear_kernel,
        out_shape=jax.ShapeDtypeStruct((Np, Dp), out_dtype),
        grid_spec=grid_spec,
        compiler_params=pltpu.CompilerParams(
            # Independent row tiles -> shard across v7x's 2 TensorCores.
            dimension_semantics=("parallel",),
        ),
    )(repeated_id, x_p, w_t, b_p)

    return y_p[:N, :D]


if __name__ == "__main__":
    key = jax.random.PRNGKey(0)
    k_x, k_w, k_b = jax.random.split(key, 3)

    B, L, D = 2, 8, 32          # batch, seq, d_model (small demo shapes)
    R = 4                       # repeated_times
    repeated_id = 2             # the _repeated_id attribute set before forward()

    x = jax.random.normal(k_x, (B, L, D), dtype=jnp.float32)
    # PyTorch nn.Linear shapes per instance: W [D, D] ([out, in]), b [D].
    weights = jax.random.normal(k_w, (R, D, D), dtype=jnp.float32) * 0.05
    biases = jax.random.normal(k_b, (R, D), dtype=jnp.float32) * 0.01

    x_flat = x.reshape(B * L, D)
    rid = jnp.array([repeated_id], dtype=jnp.int32)

    y_flat = repeated_module_list_forward(x_flat, weights, biases, rid)
    y = y_flat.reshape(B, L, D)
    jax.block_until_ready(y)

    # Reference check (plain JAX, f32) for the selected instance.
    # Tolerance loosened because the kernel runs the matmul in bf16
    # (f32 accumulation).
    y_ref = x @ weights[repeated_id].T + biases[repeated_id]
    assert jnp.allclose(y, y_ref, atol=2e-2, rtol=2e-2), "mismatch vs reference"

    print("KERNEL_OK")
</pallas_src>

<mosaic_0001>
module attributes {stable_mosaic.version = 11 : i64} {
  func.func @_repeated_linear_kernel(%arg0: i32, %arg1: memref<1xi32, #tpu.memory_space<smem>>, %arg2: memref<16x128xbf16, #tpu.memory_space<vmem>>, %arg3: memref<1x128x128xbf16, #tpu.memory_space<vmem>>, %arg4: memref<1x1x128xf32, #tpu.memory_space<vmem>>, %arg5: memref<16x128xf32, #tpu.memory_space<vmem>>) attributes {dimension_semantics = [#tpu.dimension_semantics<parallel>], iteration_bounds = array<i64: 1>, scalar_prefetch = 1 : i64, scratch_operands = 0 : i64, tpu.core_type = #tpu.core_type<tc>, window_params = [{transform_indices = @transform_0, window_bounds = array<i64: 16, 128>}, {transform_indices = @transform_1, window_bounds = array<i64: 1, 128, 128>}, {transform_indices = @transform_2, window_bounds = array<i64: 1, 1, 128>}, {transform_indices = @transform_3, window_bounds = array<i64: 16, 128>}]} {
    %c0 = arith.constant 0 : index
    %c0_0 = arith.constant 0 : index
    %0 = vector.load %arg2[%c0, %c0_0] : memref<16x128xbf16, #tpu.memory_space<vmem>>, vector<16x128xbf16>
    %c0_1 = arith.constant 0 : index
    %c0_2 = arith.constant 0 : index
    %c0_3 = arith.constant 0 : index
    %1 = vector.load %arg3[%c0_1, %c0_2, %c0_3] : memref<1x128x128xbf16, #tpu.memory_space<vmem>>, vector<1x128x128xbf16>
    %2 = vector.shape_cast %1 : vector<1x128x128xbf16> to vector<128x128xbf16>
    %c0_4 = arith.constant 0 : index
    %c0_5 = arith.constant 0 : index
    %c0_6 = arith.constant 0 : index
    %3 = vector.load %arg4[%c0_4, %c0_5, %c0_6] : memref<1x1x128xf32, #tpu.memory_space<vmem>>, vector<1x1x128xf32>
    %4 = vector.shape_cast %3 : vector<1x1x128xf32> to vector<128xf32>
    %cst = arith.constant dense<0.000000e+00> : vector<16x128xf32>
    %5 = tpu.matmul %0, %2, %cst {dimension_numbers = #tpu.dot_dimension_numbers<[1], [0], [0], [1], [0, 0, 1, 1], [], []>} : vector<16x128xbf16>, vector<128x128xbf16>, vector<16x128xf32> -> vector<16x128xf32>
    %6 = vector.shape_cast %4 : vector<128xf32> to vector<1x128xf32>
    %7 = vector.broadcast %6 : vector<1x128xf32> to vector<16x128xf32>
    %8 = arith.addf %5, %7 : vector<16x128xf32>
    %c0_7 = arith.constant 0 : index
    %c0_8 = arith.constant 0 : index
    %9 = vector.load %arg5[%c0_7, %c0_8] : memref<16x128xf32, #tpu.memory_space<vmem>>, vector<16x128xf32>
    tpu.vector_store %arg5[%c0_7, %c0_8], %8 {strides = array<i32>} : memref<16x128xf32, #tpu.memory_space<vmem>>, vector<16x128xf32>,
    return
  }
  func.func @transform_0(%arg0: i32, %arg1: memref<1xi32, #tpu.memory_space<smem>>) -> (i32, i32) {
    %c0_i32 = arith.constant 0 : i32
    %c0_i32_0 = arith.constant 0 : i32
    return %arg0, %c0_i32 : i32, i32
  }
  func.func @transform_1(%arg0: i32, %arg1: memref<1xi32, #tpu.memory_space<smem>>) -> (i32, i32, i32) {
    %c0 = arith.constant 0 : index
    %0 = memref.load %arg1[%c0] : memref<1xi32, #tpu.memory_space<smem>>
    %c0_i32 = arith.constant 0 : i32
    %c0_i32_0 = arith.constant 0 : i32
    %c0_i32_1 = arith.constant 0 : i32
    return %0, %c0_i32, %c0_i32_0 : i32, i32, i32
  }
  func.func @transform_2(%arg0: i32, %arg1: memref<1xi32, #tpu.memory_space<smem>>) -> (i32, i32, i32) {
    %c0 = arith.constant 0 : index
    %0 = memref.load %arg1[%c0] : memref<1xi32, #tpu.memory_space<smem>>
    %c0_i32 = arith.constant 0 : i32
    %c0_i32_0 = arith.constant 0 : i32
    %c0_i32_1 = arith.constant 0 : i32
    return %0, %c0_i32, %c0_i32_0 : i32, i32, i32
  }
  func.func @transform_3(%arg0: i32, %arg1: memref<1xi32, #tpu.memory_space<smem>>) -> (i32, i32) {
    %c0_i32 = arith.constant 0 : i32
    %c0_i32_0 = arith.constant 0 : i32
    return %arg0, %c0_i32 : i32, i32
  }
}

</mosaic_0001>

<llo_original>
// kernel: tpu_custom_call.1
$region0: #{tpu_custom_call.1}
  #allocation0 [shape = 'u32[]', space=smem, size = 0x4, offset = 0x4, fixed_abs, tag = 'smem constant byte address 0x4 - core index']
  #allocation1 [shape = 'u32[144,128]{1,0:T(1,128)}', space=vmem, size = 0x12000, scoped, tag = 'internal scratch']
  #allocation2 [shape = 's32[1]{0}', space=sflag, size = 0x4, scoped, tag = 'scoped memory for tpu_custom_call.1']
  #allocation3 [shape = 's32[1]{0:T(128)S(6)}', space=smem, size = 0x200, scoped, tag = 'prefetched SMEM operand 0']
  %s0 = inlined_call_operand.<no memory space> [shape: s32[1], index: 0, kind: input, shape index: {}]
  %s1 = inlined_call_operand.hbm [shape: bf16[16,128], index: 1, kind: input, shape index: {}]
  %s2 = inlined_call_operand.hbm [shape: bf16[4,128,128], index: 2, kind: input, shape index: {}]
  %s3 = inlined_call_operand.vmem [shape: f32[4,1,128], index: 3, kind: input, shape index: {}]
  %s4 = inlined_call_operand.hbm [shape: f32[16,128], index: 4, kind: output, shape index: {}]
  %s5 = sld [smem:[#allocation0]]
  $region30: #{tpu_custom_call.1} parent=0
    _
  %s7 = ssub.s32 1, %s5
  %s8 = scalar_select 0, %s7, %s5
  %9 = sst [smem:[#allocation3]] %s0
  $region1: #{tpu_custom_call.1} parent=0
    #allocation4 [shape = 'u8[4096]{0}', space=vmem, size = 0x1000, scoped, tag = 'input window, operand 1, single buffered']
    #allocation5 [shape = 's32[1]{0}', space=sflag, size = 0x4, scoped, tag = 'scoped memory for tpu_custom_call.1']
    #allocation6 [shape = 's32[1]{0}', space=sflag, size = 0x4, scoped, tag = 'scoped memory for tpu_custom_call.1']
    #allocation7 [shape = 'u8[32768]{0}', space=vmem, size = 0x8000, scoped, tag = 'input window, operand 2, single buffered']
    #allocation8 [shape = 's32[1]{0}', space=sflag, size = 0x4, scoped, tag = 'scoped memory for tpu_custom_call.1']
    #allocation9 [shape = 'u8[8192]{0}', space=vmem, size = 0x2000, scoped, tag = 'output window, operand 0, single buffered']
    %10 = vsyncpa [#allocation5], 0
    %11 = vsyncpa [#allocation8], 0
    %12 = vsyncpa [#allocation6], 0
    // Predicated region
    $region2: #{tpu_custom_call.1} parent=1 // pred_check
      _
    $region3: #{tpu_custom_call.1} parent=1 // pred_check_branch
      %14 = sbr.rel (0) target = $region5
    $region4: #{tpu_custom_call.1} parent=1 // pred_region
      %s16 = ssub.s32 128, 128
      %17 = vsyncadd [#allocation5], %s16
      %s18 = sshll.u32 [#allocation4], 4
      %s19 = int_to_ptr.vmem [resolvable:$true] %s18
      %24 = dma.hbm_to_vmem [thread:$0]  %s1, 128, %s19, [#allocation5], 64, 64, 4
    $region5: #{tpu_custom_call.1} parent=1 // pred_fallthru
      _
    // Predicated region
    $region6: #{tpu_custom_call.1} parent=1 // pred_check
      _
    $region7: #{tpu_custom_call.1} parent=1 // pred_check_branch
      %26 = sbr.rel (0) target = $region9
    $region8: #{tpu_custom_call.1} parent=1 // pred_region
      %s27 = sld [smem:[#allocation3]]
      %s29 = ssub.s32 1024, 1024
      %30 = vsyncadd [#allocation8], %s29
      %s31 = smul.addr %s27, 16
      %s32 = smul.addr %s31, 64
      %s33 = scalar_lea.hbm %s2, %s32
      %s34 = sshll.u32 [#allocation7], 4
      %s35 = int_to_ptr.vmem [resolvable:$true] %s34
      %40 = dma.hbm_to_vmem [thread:$0]  %s33, 1024, %s35, [#allocation8], 64, 64, 4
    $region9: #{tpu_custom_call.1} parent=1 // pred_fallthru
      _
    // Predicated region
    $region10: #{tpu_custom_call.1} parent=1 // pred_check
      _
    $region11: #{tpu_custom_call.1} parent=1 // pred_check_branch
      %42 = sbr.rel (0) target = $region13
    $region12: #{tpu_custom_call.1} parent=1 // pred_region
      %s43 = sld [smem:[#allocation3]]
      %p44 = scmp.lt.s32.totalorder %s43, 3
      %s45 = scalar_select %p44, %s43, 3
      %s46 = scalar_lea.vmem %s3, %s45
      %s47 = sld [smem:[#allocation3]]
    $region13: #{tpu_custom_call.1} parent=1 // pred_fallthru
      _
    // Predicated region
    $region14: #{tpu_custom_call.1} parent=1 // pred_check
      _
    $region15: #{tpu_custom_call.1} parent=1 // pred_check_branch
      %49 = sbr.rel (0) target = $region17
    $region16: #{tpu_custom_call.1} parent=1 // pred_region
      %50 = dma.done [#allocation5], 128
    $region17: #{tpu_custom_call.1} parent=1 // pred_fallthru
      _
    // Predicated region
    $region18: #{tpu_custom_call.1} parent=1 // pred_check
      _
    $region19: #{tpu_custom_call.1} parent=1 // pred_check_branch
      %52 = sbr.rel (0) target = $region21
    $region20: #{tpu_custom_call.1} parent=1 // pred_region
      %53 = dma.done [#allocation8], 1024
    $region21: #{tpu_custom_call.1} parent=1 // pred_fallthru
      _
    %s54 = sld [smem:[#allocation3]]
    %p55 = scmp.lt.s32.totalorder %s54, 3
    %s56 = scalar_select %p55, %s54, 3
    %s57 = scalar_lea.vmem %s3, %s56
    %s58 = sld [smem:[#allocation3]]
    %s59 = sld [smem:[#allocation3]]
    %p60 = scmp.lt.s32.totalorder %s59, 3
    %s61 = scalar_select %p60, %s59, 3
    %s62 = scalar_lea.vmem %s3, %s61
    %s63 = sld [smem:[#allocation3]]
    %v65 = vld [vmem:[#allocation4] sm:$0xf]
    %v66 = vld [vmem:[#allocation4 + $0x4] sm:$0xf]
    %v67 = vld [vmem:[#allocation7] sm:$0xf]
    %v68 = vld [vmem:[#allocation7 + $0x4] sm:$0xf]
    %v69 = vld [vmem:[#allocation7 + $0x8] sm:$0xf]
    %v70 = vld [vmem:[#allocation7 + $0xc] sm:$0xf]
    %v71 = vld [vmem:[#allocation7 + $0x10] sm:$0xf]
    %v72 = vld [vmem:[#allocation7 + $0x14] sm:$0xf]
    %v73 = vld [vmem:[#allocation7 + $0x18] sm:$0xf]
    %v74 = vld [vmem:[#allocation7 + $0x1c] sm:$0xf]
    %v75 = vld [vmem:[#allocation7 + $0x20] sm:$0xf]
    %v76 = vld [vmem:[#allocation7 + $0x24] sm:$0xf]
    %v77 = vld [vmem:[#allocation7 + $0x28] sm:$0xf]
    %v78 = vld [vmem:[#allocation7 + $0x2c] sm:$0xf]
    %v79 = vld [vmem:[#allocation7 + $0x30] sm:$0xf]
    %v80 = vld [vmem:[#allocation7 + $0x34] sm:$0xf]
    %v81 = vld [vmem:[#allocation7 + $0x38] sm:$0xf]
    %v82 = vld [vmem:[#allocation7 + $0x3c] sm:$0xf]
    %v83 = vld [vmem:[%s62] sm:$0x1]
    %v85 = vlaneseq
    %v86 = vshrl.u32 %v85, 7
    %v87 = vsub.s32 0, %v86
    %v88 = vrot.slane %v83, %v87
    %v92 = vunpack.c.l.b16 %v65
    %v93 = vunpack.c.l.b16 %v66
    %v94 = vpack.c.b16 %v93, %v92
    %v112 = vunpack.c.l.b16 %v67
    %v113 = vunpack.c.l.b16 %v68
    %v114 = vunpack.c.l.b16 %v69
    %v115 = vunpack.c.l.b16 %v70
    %v116 = vunpack.c.l.b16 %v71
    %v117 = vunpack.c.l.b16 %v72
    %v118 = vunpack.c.l.b16 %v73
    %v119 = vunpack.c.l.b16 %v74
    %v120 = vunpack.c.l.b16 %v75
    %v121 = vunpack.c.l.b16 %v76
    %v122 = vunpack.c.l.b16 %v77
    %v123 = vunpack.c.l.b16 %v78
    %v124 = vunpack.c.l.b16 %v79
    %v125 = vunpack.c.l.b16 %v80
    %v126 = vunpack.c.l.b16 %v81
    %v127 = vunpack.c.l.b16 %v82
    %v128 = vpack.c.b16 %v113, %v112
    %v129 = vpack.c.b16 %v115, %v114
    %v130 = vpack.c.b16 %v117, %v116
    %v131 = vpack.c.b16 %v119, %v118
    %v132 = vpack.c.b16 %v121, %v120
    %v133 = vpack.c.b16 %v123, %v122
    %v134 = vpack.c.b16 %v125, %v124
    %v135 = vpack.c.b16 %v127, %v126
    %144 = vmatprep.subr.bf16.mxu0 0
    %145 = vmatpush1.bf16.msra.mxu0 %v128
    %146 = vmatprep.subr.bf16.mxu0 0
    %147 = vmatpush1.bf16.msra.mxu0 %v129
    %148 = vmatprep.subr.bf16.mxu0 0
    %149 = vmatpush1.bf16.msra.mxu0 %v130
    %150 = vmatprep.subr.bf16.mxu0 0
    %151 = vmatpush1.bf16.msra.mxu0 %v131
    %152 = vmatprep.subr.bf16.mxu0 0
    %153 = vmatpush1.bf16.msra.mxu0 %v132
    %154 = vmatprep.subr.bf16.mxu0 0
    %155 = vmatpush1.bf16.msra.mxu0 %v133
    %156 = vmatprep.subr.bf16.mxu0 0
    %157 = vmatpush1.bf16.msra.mxu0 %v134
    %158 = vmatprep.subr.bf16.mxu0 0
    %159 = vmatpush1.bf16.msra.mxu0 %v135
    %160 = vmatprep.subr.bf16.mxu0 0
    %161 = vmatpush1.bf16.msra.mxu0 0
    %162 = vmatprep.subr.bf16.mxu0 0
    %163 = vmatpush1.bf16.msra.mxu0 0
    %164 = vmatprep.subr.bf16.mxu0 0
    %165 = vmatpush1.bf16.msra.mxu0 0
    %166 = vmatprep.subr.bf16.mxu0 0
    %167 = vmatpush1.bf16.msra.mxu0 0
    %168 = vmatprep.subr.bf16.mxu0 0
    %169 = vmatpush1.bf16.msra.mxu0 0
    %170 = vmatprep.subr.bf16.mxu0 0
    %171 = vmatpush1.bf16.msra.mxu0 0
    %172 = vmatprep.subr.bf16.mxu0 0
    %173 = vmatpush1.bf16.msra.mxu0 0
    %174 = vmatprep.subr.bf16.mxu0 0
    %175 = vmatpush1.bf16.msra.mxu0 0
    %176 = vmatprep.mubr.bf16.mxu0 0
    %177 = vmatmul.mubr.bf16.gmra.mrb[0].mxu0 %v94
    %v178 = vpop.f32.mrb[0].mxu0
    %v179 = vadd.f32 %v88, %v178
    %v180 = vpop.f32.mrb[0].mxu0
    %v181 = vpop.f32.mrb[0].mxu0
    %v182 = vadd.f32 %v88, %v181
    %v183 = vpop.f32.mrb[0].mxu0
    %184 = vdwg.mxu0
    %185 = vst [vmem:[#allocation9] sm:$0xff] %v179
    %186 = vst [vmem:[#allocation9 + $0x8] sm:$0xff] %v182
    // Predicated region
    $region22: #{tpu_custom_call.1} parent=1 // pred_check
      _
    $region23: #{tpu_custom_call.1} parent=1 // pred_check_branch
      %188 = sbr.rel (0) target = $region25
    $region24: #{tpu_custom_call.1} parent=1 // pred_region
      %s190 = ssub.s32 256, 256
      %191 = vsyncadd [#allocation6], %s190
      %s192 = sshll.u32 [#allocation9], 4
      %s193 = int_to_ptr.vmem [resolvable:$true] %s192
      %198 = dma.vmem_to_hbm [thread:$0]  %s193, 256, %s4, [#allocation6], 128, 128, 8
    $region25: #{tpu_custom_call.1} parent=1 // pred_fallthru
      _
    // Predicated region
    $region26: #{tpu_custom_call.1} parent=1 // pred_check
      _
    $region27: #{tpu_custom_call.1} parent=1 // pred_check_branch
      %200 = sbr.rel (0) target = $region29
    $region28: #{tpu_custom_call.1} parent=1 // pred_region
      %201 = dma.done [#allocation6], 256
    $region29: #{tpu_custom_call.1} parent=1 // pred_fallthru
      _
    %202 = vsyncpa [#allocation5], 1
    %203 = vsyncpa [#allocation8], 1
    %204 = vsyncpa [#allocation6], 1

</llo_original>
